<compile_context>
chip_gen: v7x
topology: tpu7x:2x2x1
jax: 0.10.0
libtpu: 0.0.40
codegen_flags: <defaults>
</compile_context>

<pallas_src>
import functools

import jax
import jax.numpy as jnp
from jax import lax
from jax.experimental import pallas as pl
from jax.experimental.pallas import tpu as pltpu


def _pow(x, p_exp, p_is_int):
    """Elementwise x**p.  Integer p lowers to VPU multiplies, not EUP pow."""
    if p_is_int:
        ip = int(p_exp)
        if ip == 1:
            return x
        return lax.integer_pow(x, ip)
    return x ** p_exp


def _dice_kernel(p_ref, t_ref, loss_ref, num_acc, den_acc, *,
                 smooth, p_exp, p_is_int, d_total, tile_d, chunk,
                 need_mask, num_d_tiles):
    kd = pl.program_id(1)  # feature (reduction) axis — innermost

    @pl.when(kd == 0)
    def _init():
        num_acc[...] = jnp.zeros_like(num_acc)
        den_acc[...] = jnp.zeros_like(den_acc)

    bn = p_ref.shape[0]
    n_chunks = tile_d // chunk
    base = kd * tile_d

    def accumulate(masked):
        if masked:
            lane = lax.broadcasted_iota(jnp.int32, (bn, chunk), 1)
        # Statically-unrolled loop over lane-aligned chunks of the tile:
        # static slices + VPU elementwise accumulation only, fully hidden
        # behind the HBM->VMEM DMA stream.
        for c in range(n_chunks):
            pc = p_ref[:, c * chunk:(c + 1) * chunk].astype(jnp.float32)
            tc = t_ref[:, c * chunk:(c + 1) * chunk].astype(jnp.float32)
            prod = pc * tc
            pw = _pow(pc, p_exp, p_is_int) + _pow(tc, p_exp, p_is_int)
            if masked:
                valid = (base + c * chunk + lane) < d_total
                prod = jnp.where(valid, prod, 0.0)
                pw = jnp.where(valid, pw, 0.0)
            num_acc[...] += prod
            den_acc[...] += pw

    if not need_mask:
        accumulate(False)
    elif num_d_tiles == 1:
        accumulate(True)
    else:
        # Only the last feature tile is ragged: keep the steady state
        # select-free and pay the mask once.
        last = pl.num_programs(1) - 1

        @pl.when(kd < last)
        def _steady():
            accumulate(False)

        @pl.when(kd == last)
        def _ragged():
            accumulate(True)

    @pl.when(kd == pl.num_programs(1) - 1)
    def _finalize():
        # Single cross-lane (XLU) reduction per batch tile, only at finalize.
        num = jnp.sum(num_acc[...], axis=1, keepdims=True) + smooth
        den = jnp.sum(den_acc[...], axis=1, keepdims=True) + smooth
        loss_ref[...] = 1.0 - num / den


def binary_dice_loss(predict, target, smooth=1.0, p=2, reduction="mean",
                     tile_bytes=2 * 1024 * 1024, max_tile_d=16384, bn=None):
    """JAX/Pallas equivalent of BinaryDiceLoss.forward."""
    assert predict.shape[0] == target.shape[0], \
        "predict & target batch size don't match"
    n = predict.shape[0]

    # Flatten to (N, D) exactly like torch .view(N, -1) — no padding / copies.
    pred2 = predict.reshape(n, -1)
    targ2 = target.reshape(n, -1)
    d = pred2.shape[1]

    # Batch tile: sublane-aligned for the input dtype (8 f32 / 16 bf16),
    # capped at 128 rows to bound accumulator size.
    itemsize = jnp.dtype(pred2.dtype).itemsize
    sub = {4: 8, 2: 16, 1: 32}.get(itemsize, 8)
    if bn is None:
        bn = n if n <= sub else min((n // sub) * sub, 128)

    # Feature tile: multiple of 128, sized so one (bn, tile_d) input buffer
    # stays within `tile_bytes` (2 inputs x 2 pipeline buffers <= ~4x that),
    # capped for bounded inner-loop unroll and by D rounded up to 128.
    d_aligned = pl.cdiv(d, 128) * 128
    budget = max(128, ((tile_bytes // (bn * itemsize)) // 128) * 128)
    tile_d = max(128, min(d_aligned, budget, max_tile_d))
    # Inner chunk width (accumulator lane width): largest of 512/256/128
    # that divides tile_d.
    chunk = 512 if tile_d % 512 == 0 else (256 if tile_d % 256 == 0 else 128)

    gb = pl.cdiv(n, bn)
    gd = pl.cdiv(d, tile_d)
    need_mask = (d % tile_d) != 0  # ragged last feature tile exists

    p_float = float(p)
    p_is_int = p_float.is_integer()

    kernel = functools.partial(
        _dice_kernel, smooth=float(smooth), p_exp=p, p_is_int=p_is_int,
        d_total=d, tile_d=tile_d, chunk=chunk, need_mask=need_mask,
        num_d_tiles=gd)

    per_sample = pl.pallas_call(
        kernel,
        out_shape=jax.ShapeDtypeStruct((n, 1), jnp.float32),
        grid_spec=pltpu.PrefetchScalarGridSpec(
            num_scalar_prefetch=0,
            grid=(gb, gd),
            in_specs=[
                pl.BlockSpec((bn, tile_d), lambda kb, kd: (kb, kd)),
                pl.BlockSpec((bn, tile_d), lambda kb, kd: (kb, kd)),
            ],
            out_specs=pl.BlockSpec((bn, 1), lambda kb, kd: (kb, 0)),
            scratch_shapes=[
                pltpu.VMEM((bn, chunk), jnp.float32),
                pltpu.VMEM((bn, chunk), jnp.float32),
            ],
        ),
        compiler_params=pltpu.CompilerParams(
            # Batch tiles are independent (megacore / v7x 2-TC sharding);
            # the feature axis carries the resident accumulators.
            dimension_semantics=("parallel", "arbitrary"),
        ),
    )(pred2, targ2)

    loss = per_sample[:, 0]  # shape (N,)

    if reduction == "mean":
        return jnp.mean(loss)
    elif reduction == "sum":
        return jnp.sum(loss)
    elif reduction == "none":
        return loss
    else:
        raise Exception("Unexpected reduction {}".format(reduction))


def _reference(predict, target, smooth=1.0, p=2, reduction="mean"):
    n = predict.shape[0]
    pr = predict.reshape(n, -1).astype(jnp.float32)
    tg = target.reshape(n, -1).astype(jnp.float32)
    num = jnp.sum(pr * tg, axis=1) + smooth
    den = jnp.sum(pr ** p + tg ** p, axis=1) + smooth
    loss = 1.0 - num / den
    if reduction == "mean":
        return jnp.mean(loss)
    elif reduction == "sum":
        return jnp.sum(loss)
    return loss


if __name__ == "__main__":
    key = jax.random.PRNGKey(0)
    k1, k2, k3, k4 = jax.random.split(key, 4)

    # Small shapes: batch=2, channels=4, spatial=16 (NCHW as in PyTorch).
    x = jax.nn.sigmoid(jax.random.normal(k1, (2, 4, 16, 16), dtype=jnp.float32))
    y = (jax.random.uniform(k2, (2, 4, 16, 16)) > 0.5).astype(jnp.float32)

    out_mean = binary_dice_loss(x, y, smooth=1.0, p=2, reduction="mean")
    out_mean = jax.block_until_ready(out_mean)
    ref_mean = _reference(x, y, smooth=1.0, p=2, reduction="mean")
    assert jnp.allclose(out_mean, ref_mean, rtol=1e-5, atol=1e-5), (out_mean, ref_mean)

    out_none = binary_dice_loss(x, y, smooth=1.0, p=2, reduction="none")
    out_none = jax.block_until_ready(out_none)
    ref_none = _reference(x, y, smooth=1.0, p=2, reduction="none")
    assert jnp.allclose(out_none, ref_none, rtol=1e-5, atol=1e-5), (out_none, ref_none)

    # Ragged case: N not a multiple of the sublane tile, D not a multiple of 128.
    x2 = jax.nn.sigmoid(jax.random.normal(k3, (10, 33), dtype=jnp.float32))
    y2 = (jax.random.uniform(k4, (10, 33)) > 0.5).astype(jnp.float32)

    out_sum = binary_dice_loss(x2, y2, smooth=1.0, p=2, reduction="sum")
    out_sum = jax.block_until_ready(out_sum)
    ref_sum = _reference(x2, y2, smooth=1.0, p=2, reduction="sum")
    assert jnp.allclose(out_sum, ref_sum, rtol=1e-5, atol=1e-5), (out_sum, ref_sum)

    out2 = binary_dice_loss(x2, y2, smooth=1.0, p=2, reduction="none")
    out2 = jax.block_until_ready(out2)
    ref2 = _reference(x2, y2, smooth=1.0, p=2, reduction="none")
    assert jnp.allclose(out2, ref2, rtol=1e-5, atol=1e-5), (out2, ref2)

    print("KERNEL_OK")
</pallas_src>

<mosaic_0001>
module attributes {stable_mosaic.version = 11 : i64} {
  func.func @_dice_kernel(%arg0: i32, %arg1: i32, %arg2: memref<2x1024xf32, #tpu.memory_space<vmem>>, %arg3: memref<2x1024xf32, #tpu.memory_space<vmem>>, %arg4: memref<2x1xf32, #tpu.memory_space<vmem>>, %arg5: memref<2x512xf32, #tpu.memory_space<vmem>>, %arg6: memref<2x512xf32, #tpu.memory_space<vmem>>) attributes {dimension_semantics = [#tpu.dimension_semantics<parallel>, #tpu.dimension_semantics<arbitrary>], iteration_bounds = array<i64: 1, 1>, scalar_prefetch = 0 : i64, scratch_operands = 2 : i64, tpu.core_type = #tpu.core_type<tc>, window_params = [{transform_indices = @transform_0, window_bounds = array<i64: 2, 1024>}, {transform_indices = @transform_1, window_bounds = array<i64: 2, 1024>}, {transform_indices = @transform_2, window_bounds = array<i64: 2, 1>}]} {
    %c0_i32 = arith.constant 0 : i32
    %0 = arith.cmpi eq, %arg1, %c0_i32 : i32
    %1 = arith.extui %0 : i1 to i32
    %c0_i32_0 = arith.constant 0 : i32
    %2 = arith.cmpi ne, %1, %c0_i32_0 : i32
    scf.if %2 {
      %cst = arith.constant 0.000000e+00 : f32
      %30 = vector.broadcast %cst : f32 to vector<2x512xf32>
      %c0_25 = arith.constant 0 : index
      %c0_26 = arith.constant 0 : index
      %31 = vector.load %arg5[%c0_25, %c0_26] : memref<2x512xf32, #tpu.memory_space<vmem>>, vector<2x512xf32>
      tpu.vector_store %arg5[%c0_25, %c0_26], %30 {strides = array<i32>} : memref<2x512xf32, #tpu.memory_space<vmem>>, vector<2x512xf32>,
      %cst_27 = arith.constant 0.000000e+00 : f32
      %32 = vector.broadcast %cst_27 : f32 to vector<2x512xf32>
      %c0_28 = arith.constant 0 : index
      %c0_29 = arith.constant 0 : index
      %33 = vector.load %arg6[%c0_28, %c0_29] : memref<2x512xf32, #tpu.memory_space<vmem>>, vector<2x512xf32>
      tpu.vector_store %arg6[%c0_28, %c0_29], %32 {strides = array<i32>} : memref<2x512xf32, #tpu.memory_space<vmem>>, vector<2x512xf32>,
    } else {
    }
    %c0 = arith.constant 0 : index
    %c0_1 = arith.constant 0 : index
    %3 = vector.load %arg2[%c0, %c0_1] : memref<2x1024xf32, #tpu.memory_space<vmem>>, vector<2x512xf32>
    %c0_2 = arith.constant 0 : index
    %c0_3 = arith.constant 0 : index
    %4 = vector.load %arg3[%c0_2, %c0_3] : memref<2x1024xf32, #tpu.memory_space<vmem>>, vector<2x512xf32>
    %5 = arith.mulf %3, %4 : vector<2x512xf32>
    %6 = arith.mulf %3, %3 : vector<2x512xf32>
    %7 = arith.mulf %4, %4 : vector<2x512xf32>
    %8 = arith.addf %6, %7 : vector<2x512xf32>
    %c0_4 = arith.constant 0 : index
    %c0_5 = arith.constant 0 : index
    %9 = vector.load %arg5[%c0_4, %c0_5] : memref<2x512xf32, #tpu.memory_space<vmem>>, vector<2x512xf32>
    %10 = arith.addf %9, %5 : vector<2x512xf32>
    %c0_6 = arith.constant 0 : index
    %c0_7 = arith.constant 0 : index
    %11 = vector.load %arg5[%c0_6, %c0_7] : memref<2x512xf32, #tpu.memory_space<vmem>>, vector<2x512xf32>
    tpu.vector_store %arg5[%c0_6, %c0_7], %10 {strides = array<i32>} : memref<2x512xf32, #tpu.memory_space<vmem>>, vector<2x512xf32>,
    %c0_8 = arith.constant 0 : index
    %c0_9 = arith.constant 0 : index
    %12 = vector.load %arg6[%c0_8, %c0_9] : memref<2x512xf32, #tpu.memory_space<vmem>>, vector<2x512xf32>
    %13 = arith.addf %12, %8 : vector<2x512xf32>
    %c0_10 = arith.constant 0 : index
    %c0_11 = arith.constant 0 : index
    %14 = vector.load %arg6[%c0_10, %c0_11] : memref<2x512xf32, #tpu.memory_space<vmem>>, vector<2x512xf32>
    tpu.vector_store %arg6[%c0_10, %c0_11], %13 {strides = array<i32>} : memref<2x512xf32, #tpu.memory_space<vmem>>, vector<2x512xf32>,
    %c0_12 = arith.constant 0 : index
    %c512 = arith.constant 512 : index
    %15 = vector.load %arg2[%c0_12, %c512] : memref<2x1024xf32, #tpu.memory_space<vmem>>, vector<2x512xf32>
    %c0_13 = arith.constant 0 : index
    %c512_14 = arith.constant 512 : index
    %16 = vector.load %arg3[%c0_13, %c512_14] : memref<2x1024xf32, #tpu.memory_space<vmem>>, vector<2x512xf32>
    %17 = arith.mulf %15, %16 : vector<2x512xf32>
    %18 = arith.mulf %15, %15 : vector<2x512xf32>
    %19 = arith.mulf %16, %16 : vector<2x512xf32>
    %20 = arith.addf %18, %19 : vector<2x512xf32>
    %c0_15 = arith.constant 0 : index
    %c0_16 = arith.constant 0 : index
    %21 = vector.load %arg5[%c0_15, %c0_16] : memref<2x512xf32, #tpu.memory_space<vmem>>, vector<2x512xf32>
    %22 = arith.addf %21, %17 : vector<2x512xf32>
    %c0_17 = arith.constant 0 : index
    %c0_18 = arith.constant 0 : index
    %23 = vector.load %arg5[%c0_17, %c0_18] : memref<2x512xf32, #tpu.memory_space<vmem>>, vector<2x512xf32>
    tpu.vector_store %arg5[%c0_17, %c0_18], %22 {strides = array<i32>} : memref<2x512xf32, #tpu.memory_space<vmem>>, vector<2x512xf32>,
    %c0_19 = arith.constant 0 : index
    %c0_20 = arith.constant 0 : index
    %24 = vector.load %arg6[%c0_19, %c0_20] : memref<2x512xf32, #tpu.memory_space<vmem>>, vector<2x512xf32>
    %25 = arith.addf %24, %20 : vector<2x512xf32>
    %c0_21 = arith.constant 0 : index
    %c0_22 = arith.constant 0 : index
    %26 = vector.load %arg6[%c0_21, %c0_22] : memref<2x512xf32, #tpu.memory_space<vmem>>, vector<2x512xf32>
    tpu.vector_store %arg6[%c0_21, %c0_22], %25 {strides = array<i32>} : memref<2x512xf32, #tpu.memory_space<vmem>>, vector<2x512xf32>,
    %c0_i32_23 = arith.constant 0 : i32
    %27 = arith.cmpi eq, %arg1, %c0_i32_23 : i32
    %28 = arith.extui %27 : i1 to i32
    %c0_i32_24 = arith.constant 0 : i32
    %29 = arith.cmpi ne, %28, %c0_i32_24 : i32
    scf.if %29 {
      %c0_25 = arith.constant 0 : index
      %c0_26 = arith.constant 0 : index
      %30 = vector.load %arg5[%c0_25, %c0_26] : memref<2x512xf32, #tpu.memory_space<vmem>>, vector<2x512xf32>
      %cst = arith.constant dense<0.000000e+00> : vector<2xf32>
      %31 = vector.multi_reduction <add>, %30, %cst [1] : vector<2x512xf32> to vector<2xf32>
      %32 = vector.shape_cast %31 : vector<2xf32> to vector<2x1xf32>
      %cst_27 = arith.constant 1.000000e+00 : f32
      %33 = vector.broadcast %cst_27 : f32 to vector<2x1xf32>
      %34 = arith.addf %32, %33 : vector<2x1xf32>
      %c0_28 = arith.constant 0 : index
      %c0_29 = arith.constant 0 : index
      %35 = vector.load %arg6[%c0_28, %c0_29] : memref<2x512xf32, #tpu.memory_space<vmem>>, vector<2x512xf32>
      %cst_30 = arith.constant dense<0.000000e+00> : vector<2xf32>
      %36 = vector.multi_reduction <add>, %35, %cst_30 [1] : vector<2x512xf32> to vector<2xf32>
      %37 = vector.shape_cast %36 : vector<2xf32> to vector<2x1xf32>
      %cst_31 = arith.constant 1.000000e+00 : f32
      %38 = vector.broadcast %cst_31 : f32 to vector<2x1xf32>
      %39 = arith.addf %37, %38 : vector<2x1xf32>
      %40 = arith.divf %34, %39 : vector<2x1xf32>
      %cst_32 = arith.constant 1.000000e+00 : f32
      %41 = vector.broadcast %cst_32 : f32 to vector<2x1xf32>
      %42 = arith.subf %41, %40 : vector<2x1xf32>
      %c0_33 = arith.constant 0 : index
      %c0_34 = arith.constant 0 : index
      %43 = vector.load %arg4[%c0_33, %c0_34] : memref<2x1xf32, #tpu.memory_space<vmem>>, vector<2x1xf32>
      tpu.vector_store %arg4[%c0_33, %c0_34], %42 {strides = array<i32>} : memref<2x1xf32, #tpu.memory_space<vmem>>, vector<2x1xf32>,
    } else {
    }
    return
  }
  func.func @transform_0(%arg0: i32, %arg1: i32) -> (i32, i32) {
    %c0_i32 = arith.constant 0 : i32
    return %arg0, %arg1 : i32, i32
  }
  func.func @transform_1(%arg0: i32, %arg1: i32) -> (i32, i32) {
    %c0_i32 = arith.constant 0 : i32
    return %arg0, %arg1 : i32, i32
  }
  func.func @transform_2(%arg0: i32, %arg1: i32) -> (i32, i32) {
    %c0_i32 = arith.constant 0 : i32
    %c0_i32_0 = arith.constant 0 : i32
    return %arg0, %c0_i32 : i32, i32
  }
}

</mosaic_0001>

<llo_original>
// kernel: tpu_custom_call.1
$region0: #{tpu_custom_call.1}
  #allocation0 [shape = 'u32[]', space=smem, size = 0x4, offset = 0x4, fixed_abs, tag = 'smem constant byte address 0x4 - core index']
  #allocation1 [shape = 'u32[144,128]{1,0:T(1,128)}', space=vmem, size = 0x12000, scoped, tag = 'internal scratch']
  #allocation2 [shape = 'f32[2,512]{1,0:T(2,128)}', space=vmem, size = 0x1000, scoped, tag = 'scratch operand']
  #allocation3 [shape = 'f32[2,512]{1,0:T(2,128)}', space=vmem, size = 0x1000, scoped, tag = 'scratch operand']
  %s0 = inlined_call_operand.hbm [shape: f32[2,1024], index: 0, kind: input, shape index: {}]
  %s1 = inlined_call_operand.hbm [shape: f32[2,1024], index: 1, kind: input, shape index: {}]
  %s2 = inlined_call_operand.vmem [shape: f32[2,1], index: 2, kind: output, shape index: {}]
  %s3 = sld [smem:[#allocation0]]
  $region34: #{tpu_custom_call.1} parent=0
    _
  %s5 = ssub.s32 1, %s3
  %s6 = scalar_select 0, %s5, %s3
  $region1: #{tpu_custom_call.1} parent=0
    #allocation4 [shape = 'u8[8192]{0}', space=vmem, size = 0x2000, scoped, tag = 'input window, operand 0, single buffered']
    #allocation5 [shape = 's32[1]{0}', space=sflag, size = 0x4, scoped, tag = 'scoped memory for tpu_custom_call.1']
    #allocation6 [shape = 'u8[8192]{0}', space=vmem, size = 0x2000, scoped, tag = 'input window, operand 1, single buffered']
    #allocation7 [shape = 's32[1]{0}', space=sflag, size = 0x4, scoped, tag = 'scoped memory for tpu_custom_call.1']
    %7 = vsyncpa [#allocation5], 0
    %8 = vsyncpa [#allocation7], 0
    // Predicated region
    $region2: #{tpu_custom_call.1} parent=1 // pred_check
      _
    $region3: #{tpu_custom_call.1} parent=1 // pred_check_branch
      %10 = sbr.rel (0) target = $region5
    $region4: #{tpu_custom_call.1} parent=1 // pred_region
      %s12 = ssub.s32 256, 256
      %13 = vsyncadd [#allocation5], %s12
      %s15 = sshll.u32 [#allocation4], 4
      %s16 = int_to_ptr.vmem [resolvable:$true] %s15
      %18 = dma.hbm_to_vmem [thread:$0]  %s0, 256, %s16, [#allocation5]
    $region5: #{tpu_custom_call.1} parent=1 // pred_fallthru
      _
    // Predicated region
    $region6: #{tpu_custom_call.1} parent=1 // pred_check
      _
    $region7: #{tpu_custom_call.1} parent=1 // pred_check_branch
      %20 = sbr.rel (0) target = $region9
    $region8: #{tpu_custom_call.1} parent=1 // pred_region
      %s22 = ssub.s32 256, 256
      %23 = vsyncadd [#allocation7], %s22
      %s25 = sshll.u32 [#allocation6], 4
      %s26 = int_to_ptr.vmem [resolvable:$true] %s25
      %28 = dma.hbm_to_vmem [thread:$0]  %s1, 256, %s26, [#allocation7]
    $region9: #{tpu_custom_call.1} parent=1 // pred_fallthru
      _
    // Predicated region
    $region10: #{tpu_custom_call.1} parent=1 // pred_check
      _
    $region11: #{tpu_custom_call.1} parent=1 // pred_check_branch
      %30 = sbr.rel (0) target = $region13
    $region12: #{tpu_custom_call.1} parent=1 // pred_region
      %31 = dma.done [#allocation5], 256
    $region13: #{tpu_custom_call.1} parent=1 // pred_fallthru
      _
    // Predicated region
    $region14: #{tpu_custom_call.1} parent=1 // pred_check
      _
    $region15: #{tpu_custom_call.1} parent=1 // pred_check_branch
      %33 = sbr.rel (0) target = $region17
    $region16: #{tpu_custom_call.1} parent=1 // pred_region
      %34 = dma.done [#allocation7], 256
    $region17: #{tpu_custom_call.1} parent=1 // pred_fallthru
      _
    %p35 = scmp.eq.s32.totalorder 0, 0
    // Predicated region
    $region18: #{tpu_custom_call.1} parent=1 // pred_check
      %p36 = pneg %p35
    $region19: #{tpu_custom_call.1} parent=1 // pred_check_branch
      %38 = sbr.rel (%p36) target = $region21
    $region20: #{tpu_custom_call.1} parent=1 // pred_region
      %39 = vst [vmem:[#allocation2] sm:$0xff] 0.0
      %40 = vst [vmem:[#allocation3] sm:$0xff] 0.0
    $region21: #{tpu_custom_call.1} parent=1 // pred_fallthru
      _
    %v41 = vld [vmem:[#allocation4] sm:$0xff]
    %v42 = vld [vmem:[#allocation6] sm:$0xff]
    %v43 = vmul.f32 %v41, %v42
    %v44 = vmul.f32 %v41, %v41
    %v45 = vmul.f32 %v42, %v42
    %v46 = vadd.f32 %v44, %v45
    %v47 = vld [vmem:[#allocation2] sm:$0xff]
    %v48 = vadd.f32 %v47, %v43
    %49 = vst [vmem:[#allocation2] sm:$0xff] %v48
    %v50 = vld [vmem:[#allocation3] sm:$0xff]
    %v51 = vadd.f32 %v50, %v46
    %52 = vst [vmem:[#allocation3] sm:$0xff] %v51
    %v53 = vld [vmem:[#allocation4 + $0x8] sm:$0xff]
    %v54 = vld [vmem:[#allocation6 + $0x8] sm:$0xff]
    %v55 = vmul.f32 %v53, %v54
    %v56 = vmul.f32 %v53, %v53
    %v57 = vmul.f32 %v54, %v54
    %v58 = vadd.f32 %v56, %v57
    %v59 = vld [vmem:[#allocation2] sm:$0xff]
    %v60 = vadd.f32 %v59, %v55
    %61 = vst [vmem:[#allocation2] sm:$0xff] %v60
    %v62 = vld [vmem:[#allocation3] sm:$0xff]
    %v63 = vadd.f32 %v62, %v58
    %64 = vst [vmem:[#allocation3] sm:$0xff] %v63
    // Predicated region
    $region22: #{tpu_custom_call.1} parent=1 // pred_check
      %p65 = pneg %p35
    $region23: #{tpu_custom_call.1} parent=1 // pred_check_branch
      %67 = sbr.rel (%p65) target = $region25
    $region24: #{tpu_custom_call.1} parent=1 // pred_region
      %v68 = vld [vmem:[#allocation2] sm:$0xff]
      %v70 = vcombine.high %v68, %v68
      %v72 = vunpack.c.l.s4 1983009808
      %v73 = vunpack.c.0.s8 %v72
      %v74 = vlaneseq
      %v75 = vshrl.u32 %v74, 7
      %v76 = vsub.s32 %v73, %v75
      %v77 = vrot.slane %v68, %v76
      %v79 = vunpack.c.l.s4 1983009808
      %v80 = vunpack.c.0.s8 %v79
      %v81 = vlaneseq
      %v82 = vshrl.u32 %v81, 7
      %v83 = vsub.s32 %v80, %v82
      %v84 = vrot.slane %v70, %v83
      %v85 = vcombine.high %v77, %v77
      %v86 = vcombine.high %v84, %v84
      %vm91 = vcmask 1041408
      %v92 = vsel %vm91, %v77, 0.0
      %v93 = vsel %vm91, %v85, 0.0
      %v94 = vadd.f32 %v92, %v93
      %v95 = vsel %vm91, %v84, 0.0
      %v96 = vadd.f32 %v94, %v95
      %v97 = vsel %vm91, %v86, 0.0
      %v98 = vadd.f32 %v96, %v97
      %99 = vadd.xlane.f32.xlu0 %v98
      %v100 = vpop.xlane.xlu0 %99
      %v101 = vadd.f32 %v100, 1.0
      %v102 = vld [vmem:[#allocation3] sm:$0xff]
      %v104 = vcombine.high %v102, %v102
      %v106 = vunpack.c.l.s4 1983009808
      %v107 = vunpack.c.0.s8 %v106
      %v108 = vlaneseq
      %v109 = vshrl.u32 %v108, 7
      %v110 = vsub.s32 %v107, %v109
      %v111 = vrot.slane %v102, %v110
      %v113 = vunpack.c.l.s4 1983009808
      %v114 = vunpack.c.0.s8 %v113
      %v115 = vlaneseq
      %v116 = vshrl.u32 %v115, 7
      %v117 = vsub.s32 %v114, %v116
      %v118 = vrot.slane %v104, %v117
      %v119 = vcombine.high %v111, %v111
      %v120 = vcombine.high %v118, %v118
      %v125 = vsel %vm91, %v111, 0.0
      %v126 = vsel %vm91, %v119, 0.0
      %v127 = vadd.f32 %v125, %v126
      %v128 = vsel %vm91, %v118, 0.0
      %v129 = vadd.f32 %v127, %v128
      %v130 = vsel %vm91, %v120, 0.0
      %v131 = vadd.f32 %v129, %v130
      %132 = vadd.xlane.f32.xlu0 %v131
      %v133 = vpop.xlane.xlu0 %132
      %v134 = vadd.f32 %v133, 1.0
      %v135 = vrcp.pop %v134
      %v136 = vmul.f32 %v101, %v135
      %v137 = vsub.f32 1.0, %v136
      %vm138 = vcmask 1024
      %139 = vst.msk [vmem:[%s2] sm:$0x3] %vm138, %v137
    $region25: #{tpu_custom_call.1} parent=1 // pred_fallthru
      _
    // Predicated region
    $region26: #{tpu_custom_call.1} parent=1 // pred_check
      _
    $region27: #{tpu_custom_call.1} parent=1 // pred_check_branch
      %141 = sbr.rel (0) target = $region29
    $region28: #{tpu_custom_call.1} parent=1 // pred_region
      _
    $region29: #{tpu_custom_call.1} parent=1 // pred_fallthru
      _
    // Predicated region
    $region30: #{tpu_custom_call.1} parent=1 // pred_check
      _
    $region31: #{tpu_custom_call.1} parent=1 // pred_check_branch
      %143 = sbr.rel (0) target = $region33
    $region32: #{tpu_custom_call.1} parent=1 // pred_region
      _
    $region33: #{tpu_custom_call.1} parent=1 // pred_fallthru
      _
    %144 = vsyncpa [#allocation5], 1
    %145 = vsyncpa [#allocation7], 1

</llo_original>
